<compile_context>
chip_gen: v7x
topology: tpu7x:2x2x1
jax: 0.10.0
libtpu: 0.0.40
codegen_flags: <defaults>
</compile_context>

<pallas_src>
import functools

import jax
import jax.numpy as jnp
from jax import lax
from jax.experimental import pallas as pl
from jax.experimental.pallas import tpu as pltpu


def _round_up(x, m):
    return (x + m - 1) // m * m


def _vmem_cap_bytes():
    """Physical per-core VMEM with a fallback that is safe on every gen."""
    try:
        info = pltpu.get_tpu_info()
        cap = getattr(info, "vmem_capacity_bytes", None)
        if cap:
            return int(cap)
    except Exception:
        pass
    return 64 * 2 ** 20  # v7x-safe fallback


# ----------------------------------------------------------------------------
# Kernel 1: embedding lookup (embed=True)
# One grid step handles `tokens_per_step` tokens.  Token ids are scalar-
# prefetched into SMEM, the tied weight stays in HBM and the kernel issues
# T overlapping row-gather DMAs straight into the (T, E) output block.
# ----------------------------------------------------------------------------
def _embed_kernel(ids_ref, w_hbm, out_ref, sems, *, tokens_per_step):
    i = pl.program_id(0)
    copies = []
    for t in range(tokens_per_step):                 # static, fully unrolled
        row = ids_ref[i * tokens_per_step + t]
        cp = pltpu.make_async_copy(
            w_hbm.at[pl.ds(row, 1), :],              # (1, E) row of w in HBM
            out_ref.at[pl.ds(t, 1), :],              # gather directly to out
            sems.at[t])
        cp.start()
        copies.append(cp)
    for cp in copies:                                # all T DMAs overlap
        cp.wait()


def tied_embedding(ids, w, *, tokens_per_step=128):
    """ids: (B, S) int, w: (V, E) -> (B, S, E)."""
    B, S = ids.shape
    V, E = w.shape
    n_tok = B * S

    sub = 8 if jnp.dtype(w.dtype).itemsize == 4 else 16
    # Shrink the block for tiny inputs but keep >= 2 grid steps when possible
    # so v7x's two TensorCores both get work.
    T = int(min(tokens_per_step, max(sub, _round_up(pl.cdiv(n_tok, 2), sub))))
    n_pad = _round_up(n_tok, T)

    ids_flat = jnp.clip(ids.reshape(-1).astype(jnp.int32), 0, V - 1)
    ids_flat = jnp.zeros((n_pad,), jnp.int32).at[:n_tok].set(ids_flat)

    kernel = functools.partial(_embed_kernel, tokens_per_step=T)
    out = pl.pallas_call(
        kernel,
        out_shape=jax.ShapeDtypeStruct((n_pad, E), w.dtype),
        grid_spec=pltpu.PrefetchScalarGridSpec(
            num_scalar_prefetch=1,
            grid=(n_pad // T,),
            in_specs=[pl.BlockSpec(memory_space=pl.ANY)],   # w stays in HBM
            out_specs=pl.BlockSpec((T, E), lambda i, ids: (i, 0)),
            scratch_shapes=[pltpu.SemaphoreType.DMA((T,))]),
        compiler_params=pltpu.CompilerParams(
            dimension_semantics=("parallel",)),
    )(ids_flat, w)
    return out[:n_tok].reshape(B, S, E)


# ----------------------------------------------------------------------------
# Kernel 2: tied softmax projection (embed=False)
# logits = x @ w.T + b, tiled over (tokens, vocab, embedding).  Operands are
# already bf16 (cast in the wrapper); f32 accumulation in a VMEM scratch over
# the E grid axis; bias added and stored on the last E step.
# ----------------------------------------------------------------------------
def _logits_kernel(x_ref, w_ref, b_ref, o_ref, acc_ref):
    k = pl.program_id(2)

    @pl.when(k == 0)
    def _():
        acc_ref[...] = jnp.zeros_like(acc_ref)

    acc_ref[...] += lax.dot_general(
        x_ref[...], w_ref[...],
        dimension_numbers=(((1,), (1,)), ((), ())),   # contract on E for both
        preferred_element_type=jnp.float32)

    @pl.when(k == pl.num_programs(2) - 1)
    def _():
        o_ref[...] = (acc_ref[...] + b_ref[...]).astype(o_ref.dtype)


def tied_softmax(x, w, b, *, tm=512, tv=512, te=2048,
                 compute_dtype=jnp.bfloat16, out_dtype=jnp.float32):
    """x: (B, S, E), w: (V, E), b: (V,) -> logits (B, S, V)."""
    B, S, E = x.shape
    V, _ = w.shape
    M = B * S

    csize = jnp.dtype(compute_dtype).itemsize
    sub = 8 if csize == 4 else (32 if csize == 1 else 16)

    # Shrink tiles for small problems (dtype-correct min tiles), pad otherwise.
    tm = int(min(tm, _round_up(M, sub)))
    tv = int(min(tv, _round_up(V, 128)))
    te = int(min(te, _round_up(E, 128)))
    Mp = _round_up(M, tm)
    Vp = _round_up(V, tv)
    Ep = _round_up(E, te)

    # Cast at the boundary: halves HBM bytes for x and the re-streamed w.
    x2 = x.reshape(M, E).astype(compute_dtype)
    wc = w.astype(compute_dtype)
    if (Mp, Ep) != (M, E):
        x2 = jnp.pad(x2, ((0, Mp - M), (0, Ep - E)))
    if (Vp, Ep) != (V, E):
        wc = jnp.pad(wc, ((0, Vp - V), (0, Ep - E)))
    bp = b if Vp == V else jnp.pad(b, (0, Vp - V))
    b2 = bp.astype(jnp.float32).reshape(1, Vp)        # lane-dense bias

    # Generation-aware VMEM budget: double-buffered in/out tiles + accumulator,
    # capped at ~75% of the physical per-core VMEM (headroom for Mosaic).
    in_bytes = (tm * te + tv * te) * csize + tv * 4
    out_bytes = tm * tv * jnp.dtype(out_dtype).itemsize
    acc_bytes = tm * tv * 4
    needed = 2 * (in_bytes + out_bytes) + acc_bytes
    cap = _vmem_cap_bytes() * 3 // 4
    vmem_limit = int(min(cap, max(32 * 2 ** 20, 2 * needed)))

    out = pl.pallas_call(
        _logits_kernel,
        out_shape=jax.ShapeDtypeStruct((Mp, Vp), out_dtype),
        grid_spec=pltpu.PrefetchScalarGridSpec(
            num_scalar_prefetch=0,
            grid=(Mp // tm, Vp // tv, Ep // te),
            in_specs=[
                pl.BlockSpec((tm, te), lambda i, j, k: (i, k)),
                pl.BlockSpec((tv, te), lambda i, j, k: (j, k)),
                pl.BlockSpec((1, tv), lambda i, j, k: (0, j)),
            ],
            out_specs=pl.BlockSpec((tm, tv), lambda i, j, k: (i, j)),
            scratch_shapes=[pltpu.VMEM((tm, tv), jnp.float32)],
        ),
        compiler_params=pltpu.CompilerParams(
            dimension_semantics=("parallel", "parallel", "arbitrary"),
            vmem_limit_bytes=vmem_limit),
    )(x2, wc, b2)
    return out[:M, :V].reshape(B, S, V)


if __name__ == "__main__":
    # Small, MXU/lane friendly sizes.
    vocab_size, embedding_size = 256, 128
    batch, seq = 2, 8

    key = jax.random.PRNGKey(0)
    k_w, k_ids = jax.random.split(key)

    # torch.normal(0.0, 0.01, (V, E)) analogue; zero bias.
    w = 0.01 * jax.random.normal(k_w, (vocab_size, embedding_size), jnp.float32)
    b = jnp.zeros((vocab_size,), jnp.float32)

    ids = jax.random.randint(k_ids, (batch, seq), 0, vocab_size, jnp.int32)

    # embed=True path
    emb = tied_embedding(ids, w)
    jax.block_until_ready(emb)
    ref_emb = w[ids]
    assert jnp.allclose(emb, ref_emb, atol=1e-6), "embedding mismatch"

    # embed=False path (tied projection back to vocab logits)
    logits = tied_softmax(emb, w, b)
    jax.block_until_ready(logits)
    ref_logits = jnp.einsum("bse,ve->bsv", ref_emb, w) + b
    # bf16 MXU operands with f32 accumulation -> loose tolerance vs fp32 ref.
    assert jnp.allclose(logits, ref_logits, atol=2e-3), "logits mismatch"

    print("KERNEL_OK")
</pallas_src>

<mosaic_0001>
module attributes {stable_mosaic.version = 11 : i64} {
  func.func @_embed_kernel(%arg0: i32, %arg1: memref<16xi32, #tpu.memory_space<smem>>, %arg2: memref<256x128xf32, #tpu.memory_space<any>>, %arg3: memref<8x128xf32, #tpu.memory_space<vmem>>, %arg4: memref<8x!tpu.dma_semaphore, #tpu.memory_space<semaphore_mem>>) attributes {dimension_semantics = [#tpu.dimension_semantics<parallel>], iteration_bounds = array<i64: 2>, scalar_prefetch = 1 : i64, scratch_operands = 1 : i64, tpu.core_type = #tpu.core_type<tc>, window_params = [{}, {transform_indices = @transform_1, window_bounds = array<i64: 8, 128>}]} {
    %c8_i32 = arith.constant 8 : i32
    %0 = arith.muli %arg0, %c8_i32 : i32
    %c0_i32 = arith.constant 0 : i32
    %1 = arith.addi %0, %c0_i32 : i32
    %2 = arith.index_cast %1 : i32 to index
    %3 = memref.load %arg1[%2] : memref<16xi32, #tpu.memory_space<smem>>
    %c0_i32_0 = arith.constant 0 : i32
    %c0_i32_1 = arith.constant 0 : i32
    %4 = tpu.memref_slice %arg2[%3, %c0_i32_1] : memref<256x128xf32, #tpu.memory_space<any>> -> memref<1x128xf32, #tpu.memory_space<any>>
    %c0_i32_2 = arith.constant 0 : i32
    %c0_i32_3 = arith.constant 0 : i32
    %5 = tpu.memref_slice %arg3[%c0_i32_2, %c0_i32_3] : memref<8x128xf32, #tpu.memory_space<vmem>> -> memref<1x128xf32, #tpu.memory_space<vmem>>
    %6 = tpu.memref_slice %arg4[%c0_i32_0] : memref<8x!tpu.dma_semaphore, #tpu.memory_space<semaphore_mem>> -> memref<1x!tpu.dma_semaphore, #tpu.memory_space<semaphore_mem>>
    %7 = tpu.memref_squeeze %6 : memref<1x!tpu.dma_semaphore, #tpu.memory_space<semaphore_mem>> -> memref<!tpu.dma_semaphore, #tpu.memory_space<semaphore_mem>>
    tpu.enqueue_dma source(%4 : memref<1x128xf32, #tpu.memory_space<any>>) target(%5 : memref<1x128xf32, #tpu.memory_space<vmem>>) target_semaphore(%7 : memref<!tpu.dma_semaphore, #tpu.memory_space<semaphore_mem>>)
    %c8_i32_4 = arith.constant 8 : i32
    %8 = arith.muli %arg0, %c8_i32_4 : i32
    %c1_i32 = arith.constant 1 : i32
    %9 = arith.addi %8, %c1_i32 : i32
    %10 = arith.index_cast %9 : i32 to index
    %11 = memref.load %arg1[%10] : memref<16xi32, #tpu.memory_space<smem>>
    %c1_i32_5 = arith.constant 1 : i32
    %c0_i32_6 = arith.constant 0 : i32
    %12 = tpu.memref_slice %arg2[%11, %c0_i32_6] : memref<256x128xf32, #tpu.memory_space<any>> -> memref<1x128xf32, #tpu.memory_space<any>>
    %c1_i32_7 = arith.constant 1 : i32
    %c0_i32_8 = arith.constant 0 : i32
    %13 = tpu.memref_slice %arg3[%c1_i32_7, %c0_i32_8] : memref<8x128xf32, #tpu.memory_space<vmem>> -> memref<1x128xf32, #tpu.memory_space<vmem>>
    %14 = tpu.memref_slice %arg4[%c1_i32_5] : memref<8x!tpu.dma_semaphore, #tpu.memory_space<semaphore_mem>> -> memref<1x!tpu.dma_semaphore, #tpu.memory_space<semaphore_mem>>
    %15 = tpu.memref_squeeze %14 : memref<1x!tpu.dma_semaphore, #tpu.memory_space<semaphore_mem>> -> memref<!tpu.dma_semaphore, #tpu.memory_space<semaphore_mem>>
    tpu.enqueue_dma source(%12 : memref<1x128xf32, #tpu.memory_space<any>>) target(%13 : memref<1x128xf32, #tpu.memory_space<vmem>>) target_semaphore(%15 : memref<!tpu.dma_semaphore, #tpu.memory_space<semaphore_mem>>)
    %c8_i32_9 = arith.constant 8 : i32
    %16 = arith.muli %arg0, %c8_i32_9 : i32
    %c2_i32 = arith.constant 2 : i32
    %17 = arith.addi %16, %c2_i32 : i32
    %18 = arith.index_cast %17 : i32 to index
    %19 = memref.load %arg1[%18] : memref<16xi32, #tpu.memory_space<smem>>
    %c2_i32_10 = arith.constant 2 : i32
    %c0_i32_11 = arith.constant 0 : i32
    %20 = tpu.memref_slice %arg2[%19, %c0_i32_11] : memref<256x128xf32, #tpu.memory_space<any>> -> memref<1x128xf32, #tpu.memory_space<any>>
    %c2_i32_12 = arith.constant 2 : i32
    %c0_i32_13 = arith.constant 0 : i32
    %21 = tpu.memref_slice %arg3[%c2_i32_12, %c0_i32_13] : memref<8x128xf32, #tpu.memory_space<vmem>> -> memref<1x128xf32, #tpu.memory_space<vmem>>
    %22 = tpu.memref_slice %arg4[%c2_i32_10] : memref<8x!tpu.dma_semaphore, #tpu.memory_space<semaphore_mem>> -> memref<1x!tpu.dma_semaphore, #tpu.memory_space<semaphore_mem>>
    %23 = tpu.memref_squeeze %22 : memref<1x!tpu.dma_semaphore, #tpu.memory_space<semaphore_mem>> -> memref<!tpu.dma_semaphore, #tpu.memory_space<semaphore_mem>>
    tpu.enqueue_dma source(%20 : memref<1x128xf32, #tpu.memory_space<any>>) target(%21 : memref<1x128xf32, #tpu.memory_space<vmem>>) target_semaphore(%23 : memref<!tpu.dma_semaphore, #tpu.memory_space<semaphore_mem>>)
    %c8_i32_14 = arith.constant 8 : i32
    %24 = arith.muli %arg0, %c8_i32_14 : i32
    %c3_i32 = arith.constant 3 : i32
    %25 = arith.addi %24, %c3_i32 : i32
    %26 = arith.index_cast %25 : i32 to index
    %27 = memref.load %arg1[%26] : memref<16xi32, #tpu.memory_space<smem>>
    %c3_i32_15 = arith.constant 3 : i32
    %c0_i32_16 = arith.constant 0 : i32
    %28 = tpu.memref_slice %arg2[%27, %c0_i32_16] : memref<256x128xf32, #tpu.memory_space<any>> -> memref<1x128xf32, #tpu.memory_space<any>>
    %c3_i32_17 = arith.constant 3 : i32
    %c0_i32_18 = arith.constant 0 : i32
    %29 = tpu.memref_slice %arg3[%c3_i32_17, %c0_i32_18] : memref<8x128xf32, #tpu.memory_space<vmem>> -> memref<1x128xf32, #tpu.memory_space<vmem>>
    %30 = tpu.memref_slice %arg4[%c3_i32_15] : memref<8x!tpu.dma_semaphore, #tpu.memory_space<semaphore_mem>> -> memref<1x!tpu.dma_semaphore, #tpu.memory_space<semaphore_mem>>
    %31 = tpu.memref_squeeze %30 : memref<1x!tpu.dma_semaphore, #tpu.memory_space<semaphore_mem>> -> memref<!tpu.dma_semaphore, #tpu.memory_space<semaphore_mem>>
    tpu.enqueue_dma source(%28 : memref<1x128xf32, #tpu.memory_space<any>>) target(%29 : memref<1x128xf32, #tpu.memory_space<vmem>>) target_semaphore(%31 : memref<!tpu.dma_semaphore, #tpu.memory_space<semaphore_mem>>)
    %c8_i32_19 = arith.constant 8 : i32
    %32 = arith.muli %arg0, %c8_i32_19 : i32
    %c4_i32 = arith.constant 4 : i32
    %33 = arith.addi %32, %c4_i32 : i32
    %34 = arith.index_cast %33 : i32 to index
    %35 = memref.load %arg1[%34] : memref<16xi32, #tpu.memory_space<smem>>
    %c4_i32_20 = arith.constant 4 : i32
    %c0_i32_21 = arith.constant 0 : i32
    %36 = tpu.memref_slice %arg2[%35, %c0_i32_21] : memref<256x128xf32, #tpu.memory_space<any>> -> memref<1x128xf32, #tpu.memory_space<any>>
    %c4_i32_22 = arith.constant 4 : i32
    %c0_i32_23 = arith.constant 0 : i32
    %37 = tpu.memref_slice %arg3[%c4_i32_22, %c0_i32_23] : memref<8x128xf32, #tpu.memory_space<vmem>> -> memref<1x128xf32, #tpu.memory_space<vmem>>
    %38 = tpu.memref_slice %arg4[%c4_i32_20] : memref<8x!tpu.dma_semaphore, #tpu.memory_space<semaphore_mem>> -> memref<1x!tpu.dma_semaphore, #tpu.memory_space<semaphore_mem>>
    %39 = tpu.memref_squeeze %38 : memref<1x!tpu.dma_semaphore, #tpu.memory_space<semaphore_mem>> -> memref<!tpu.dma_semaphore, #tpu.memory_space<semaphore_mem>>
    tpu.enqueue_dma source(%36 : memref<1x128xf32, #tpu.memory_space<any>>) target(%37 : memref<1x128xf32, #tpu.memory_space<vmem>>) target_semaphore(%39 : memref<!tpu.dma_semaphore, #tpu.memory_space<semaphore_mem>>)
    %c8_i32_24 = arith.constant 8 : i32
    %40 = arith.muli %arg0, %c8_i32_24 : i32
    %c5_i32 = arith.constant 5 : i32
    %41 = arith.addi %40, %c5_i32 : i32
    %42 = arith.index_cast %41 : i32 to index
    %43 = memref.load %arg1[%42] : memref<16xi32, #tpu.memory_space<smem>>
    %c5_i32_25 = arith.constant 5 : i32
    %c0_i32_26 = arith.constant 0 : i32
    %44 = tpu.memref_slice %arg2[%43, %c0_i32_26] : memref<256x128xf32, #tpu.memory_space<any>> -> memref<1x128xf32, #tpu.memory_space<any>>
    %c5_i32_27 = arith.constant 5 : i32
    %c0_i32_28 = arith.constant 0 : i32
    %45 = tpu.memref_slice %arg3[%c5_i32_27, %c0_i32_28] : memref<8x128xf32, #tpu.memory_space<vmem>> -> memref<1x128xf32, #tpu.memory_space<vmem>>
    %46 = tpu.memref_slice %arg4[%c5_i32_25] : memref<8x!tpu.dma_semaphore, #tpu.memory_space<semaphore_mem>> -> memref<1x!tpu.dma_semaphore, #tpu.memory_space<semaphore_mem>>
    %47 = tpu.memref_squeeze %46 : memref<1x!tpu.dma_semaphore, #tpu.memory_space<semaphore_mem>> -> memref<!tpu.dma_semaphore, #tpu.memory_space<semaphore_mem>>
    tpu.enqueue_dma source(%44 : memref<1x128xf32, #tpu.memory_space<any>>) target(%45 : memref<1x128xf32, #tpu.memory_space<vmem>>) target_semaphore(%47 : memref<!tpu.dma_semaphore, #tpu.memory_space<semaphore_mem>>)
    %c8_i32_29 = arith.constant 8 : i32
    %48 = arith.muli %arg0, %c8_i32_29 : i32
    %c6_i32 = arith.constant 6 : i32
    %49 = arith.addi %48, %c6_i32 : i32
    %50 = arith.index_cast %49 : i32 to index
    %51 = memref.load %arg1[%50] : memref<16xi32, #tpu.memory_space<smem>>
    %c6_i32_30 = arith.constant 6 : i32
    %c0_i32_31 = arith.constant 0 : i32
    %52 = tpu.memref_slice %arg2[%51, %c0_i32_31] : memref<256x128xf32, #tpu.memory_space<any>> -> memref<1x128xf32, #tpu.memory_space<any>>
    %c6_i32_32 = arith.constant 6 : i32
    %c0_i32_33 = arith.constant 0 : i32
    %53 = tpu.memref_slice %arg3[%c6_i32_32, %c0_i32_33] : memref<8x128xf32, #tpu.memory_space<vmem>> -> memref<1x128xf32, #tpu.memory_space<vmem>>
    %54 = tpu.memref_slice %arg4[%c6_i32_30] : memref<8x!tpu.dma_semaphore, #tpu.memory_space<semaphore_mem>> -> memref<1x!tpu.dma_semaphore, #tpu.memory_space<semaphore_mem>>
    %55 = tpu.memref_squeeze %54 : memref<1x!tpu.dma_semaphore, #tpu.memory_space<semaphore_mem>> -> memref<!tpu.dma_semaphore, #tpu.memory_space<semaphore_mem>>
    tpu.enqueue_dma source(%52 : memref<1x128xf32, #tpu.memory_space<any>>) target(%53 : memref<1x128xf32, #tpu.memory_space<vmem>>) target_semaphore(%55 : memref<!tpu.dma_semaphore, #tpu.memory_space<semaphore_mem>>)
    %c8_i32_34 = arith.constant 8 : i32
    %56 = arith.muli %arg0, %c8_i32_34 : i32
    %c7_i32 = arith.constant 7 : i32
    %57 = arith.addi %56, %c7_i32 : i32
    %58 = arith.index_cast %57 : i32 to index
    %59 = memref.load %arg1[%58] : memref<16xi32, #tpu.memory_space<smem>>
    %c7_i32_35 = arith.constant 7 : i32
    %c0_i32_36 = arith.constant 0 : i32
    %60 = tpu.memref_slice %arg2[%59, %c0_i32_36] : memref<256x128xf32, #tpu.memory_space<any>> -> memref<1x128xf32, #tpu.memory_space<any>>
    %c7_i32_37 = arith.constant 7 : i32
    %c0_i32_38 = arith.constant 0 : i32
    %61 = tpu.memref_slice %arg3[%c7_i32_37, %c0_i32_38] : memref<8x128xf32, #tpu.memory_space<vmem>> -> memref<1x128xf32, #tpu.memory_space<vmem>>
    %62 = tpu.memref_slice %arg4[%c7_i32_35] : memref<8x!tpu.dma_semaphore, #tpu.memory_space<semaphore_mem>> -> memref<1x!tpu.dma_semaphore, #tpu.memory_space<semaphore_mem>>
    %63 = tpu.memref_squeeze %62 : memref<1x!tpu.dma_semaphore, #tpu.memory_space<semaphore_mem>> -> memref<!tpu.dma_semaphore, #tpu.memory_space<semaphore_mem>>
    tpu.enqueue_dma source(%60 : memref<1x128xf32, #tpu.memory_space<any>>) target(%61 : memref<1x128xf32, #tpu.memory_space<vmem>>) target_semaphore(%63 : memref<!tpu.dma_semaphore, #tpu.memory_space<semaphore_mem>>)
    %c0_i32_39 = arith.constant 0 : i32
    %c0_i32_40 = arith.constant 0 : i32
    %64 = tpu.memref_slice %arg2[%3, %c0_i32_40] : memref<256x128xf32, #tpu.memory_space<any>> -> memref<1x128xf32, #tpu.memory_space<any>>
    %c0_i32_41 = arith.constant 0 : i32
    %c0_i32_42 = arith.constant 0 : i32
    %65 = tpu.memref_slice %arg3[%c0_i32_41, %c0_i32_42] : memref<8x128xf32, #tpu.memory_space<vmem>> -> memref<1x128xf32, #tpu.memory_space<vmem>>
    %66 = tpu.memref_slice %arg4[%c0_i32_39] : memref<8x!tpu.dma_semaphore, #tpu.memory_space<semaphore_mem>> -> memref<1x!tpu.dma_semaphore, #tpu.memory_space<semaphore_mem>>
    %67 = tpu.memref_squeeze %66 : memref<1x!tpu.dma_semaphore, #tpu.memory_space<semaphore_mem>> -> memref<!tpu.dma_semaphore, #tpu.memory_space<semaphore_mem>>
    tpu.wait_dma2 semaphore(%67 : memref<!tpu.dma_semaphore, #tpu.memory_space<semaphore_mem>>) src(%64 : memref<1x128xf32, #tpu.memory_space<any>>) dst(%65 : memref<1x128xf32, #tpu.memory_space<vmem>>)
    %c1_i32_43 = arith.constant 1 : i32
    %c0_i32_44 = arith.constant 0 : i32
    %68 = tpu.memref_slice %arg2[%11, %c0_i32_44] : memref<256x128xf32, #tpu.memory_space<any>> -> memref<1x128xf32, #tpu.memory_space<any>>
    %c1_i32_45 = arith.constant 1 : i32
    %c0_i32_46 = arith.constant 0 : i32
    %69 = tpu.memref_slice %arg3[%c1_i32_45, %c0_i32_46] : memref<8x128xf32, #tpu.memory_space<vmem>> -> memref<1x128xf32, #tpu.memory_space<vmem>>
    %70 = tpu.memref_slice %arg4[%c1_i32_43] : memref<8x!tpu.dma_semaphore, #tpu.memory_space<semaphore_mem>> -> memref<1x!tpu.dma_semaphore, #tpu.memory_space<semaphore_mem>>
    %71 = tpu.memref_squeeze %70 : memref<1x!tpu.dma_semaphore, #tpu.memory_space<semaphore_mem>> -> memref<!tpu.dma_semaphore, #tpu.memory_space<semaphore_mem>>
    tpu.wait_dma2 semaphore(%71 : memref<!tpu.dma_semaphore, #tpu.memory_space<semaphore_mem>>) src(%68 : memref<1x128xf32, #tpu.memory_space<any>>) dst(%69 : memref<1x128xf32, #tpu.memory_space<vmem>>)
    %c2_i32_47 = arith.constant 2 : i32
    %c0_i32_48 = arith.constant 0 : i32
    %72 = tpu.memref_slice %arg2[%19, %c0_i32_48] : memref<256x128xf32, #tpu.memory_space<any>> -> memref<1x128xf32, #tpu.memory_space<any>>
    %c2_i32_49 = arith.constant 2 : i32
    %c0_i32_50 = arith.constant 0 : i32
    %73 = tpu.memref_slice %arg3[%c2_i32_49, %c0_i32_50] : memref<8x128xf32, #tpu.memory_space<vmem>> -> memref<1x128xf32, #tpu.memory_space<vmem>>
    %74 = tpu.memref_slice %arg4[%c2_i32_47] : memref<8x!tpu.dma_semaphore, #tpu.memory_space<semaphore_mem>> -> memref<1x!tpu.dma_semaphore, #tpu.memory_space<semaphore_mem>>
    %75 = tpu.memref_squeeze %74 : memref<1x!tpu.dma_semaphore, #tpu.memory_space<semaphore_mem>> -> memref<!tpu.dma_semaphore, #tpu.memory_space<semaphore_mem>>
    tpu.wait_dma2 semaphore(%75 : memref<!tpu.dma_semaphore, #tpu.memory_space<semaphore_mem>>) src(%72 : memref<1x128xf32, #tpu.memory_space<any>>) dst(%73 : memref<1x128xf32, #tpu.memory_space<vmem>>)
    %c3_i32_51 = arith.constant 3 : i32
    %c0_i32_52 = arith.constant 0 : i32
    %76 = tpu.memref_slice %arg2[%27, %c0_i32_52] : memref<256x128xf32, #tpu.memory_space<any>> -> memref<1x128xf32, #tpu.memory_space<any>>
    %c3_i32_53 = arith.constant 3 : i32
    %c0_i32_54 = arith.constant 0 : i32
    %77 = tpu.memref_slice %arg3[%c3_i32_53, %c0_i32_54] : memref<8x128xf32, #tpu.memory_space<vmem>> -> memref<1x128xf32, #tpu.memory_space<vmem>>
    %78 = tpu.memref_slice %arg4[%c3_i32_51] : memref<8x!tpu.dma_semaphore, #tpu.memory_space<semaphore_mem>> -> memref<1x!tpu.dma_semaphore, #tpu.memory_space<semaphore_mem>>
    %79 = tpu.memref_squeeze %78 : memref<1x!tpu.dma_semaphore, #tpu.memory_space<semaphore_mem>> -> memref<!tpu.dma_semaphore, #tpu.memory_space<semaphore_mem>>
    tpu.wait_dma2 semaphore(%79 : memref<!tpu.dma_semaphore, #tpu.memory_space<semaphore_mem>>) src(%76 : memref<1x128xf32, #tpu.memory_space<any>>) dst(%77 : memref<1x128xf32, #tpu.memory_space<vmem>>)
    %c4_i32_55 = arith.constant 4 : i32
    %c0_i32_56 = arith.constant 0 : i32
    %80 = tpu.memref_slice %arg2[%35, %c0_i32_56] : memref<256x128xf32, #tpu.memory_space<any>> -> memref<1x128xf32, #tpu.memory_space<any>>
    %c4_i32_57 = arith.constant 4 : i32
    %c0_i32_58 = arith.constant 0 : i32
    %81 = tpu.memref_slice %arg3[%c4_i32_57, %c0_i32_58] : memref<8x128xf32, #tpu.memory_space<vmem>> -> memref<1x128xf32, #tpu.memory_space<vmem>>
    %82 = tpu.memref_slice %arg4[%c4_i32_55] : memref<8x!tpu.dma_semaphore, #tpu.memory_space<semaphore_mem>> -> memref<1x!tpu.dma_semaphore, #tpu.memory_space<semaphore_mem>>
    %83 = tpu.memref_squeeze %82 : memref<1x!tpu.dma_semaphore, #tpu.memory_space<semaphore_mem>> -> memref<!tpu.dma_semaphore, #tpu.memory_space<semaphore_mem>>
    tpu.wait_dma2 semaphore(%83 : memref<!tpu.dma_semaphore, #tpu.memory_space<semaphore_mem>>) src(%80 : memref<1x128xf32, #tpu.memory_space<any>>) dst(%81 : memref<1x128xf32, #tpu.memory_space<vmem>>)
    %c5_i32_59 = arith.constant 5 : i32
    %c0_i32_60 = arith.constant 0 : i32
    %84 = tpu.memref_slice %arg2[%43, %c0_i32_60] : memref<256x128xf32, #tpu.memory_space<any>> -> memref<1x128xf32, #tpu.memory_space<any>>
    %c5_i32_61 = arith.constant 5 : i32
    %c0_i32_62 = arith.constant 0 : i32
    %85 = tpu.memref_slice %arg3[%c5_i32_61, %c0_i32_62] : memref<8x128xf32, #tpu.memory_space<vmem>> -> memref<1x128xf32, #tpu.memory_space<vmem>>
    %86 = tpu.memref_slice %arg4[%c5_i32_59] : memref<8x!tpu.dma_semaphore, #tpu.memory_space<semaphore_mem>> -> memref<1x!tpu.dma_semaphore, #tpu.memory_space<semaphore_mem>>
    %87 = tpu.memref_squeeze %86 : memref<1x!tpu.dma_semaphore, #tpu.memory_space<semaphore_mem>> -> memref<!tpu.dma_semaphore, #tpu.memory_space<semaphore_mem>>
    tpu.wait_dma2 semaphore(%87 : memref<!tpu.dma_semaphore, #tpu.memory_space<semaphore_mem>>) src(%84 : memref<1x128xf32, #tpu.memory_space<any>>) dst(%85 : memref<1x128xf32, #tpu.memory_space<vmem>>)
    %c6_i32_63 = arith.constant 6 : i32
    %c0_i32_64 = arith.constant 0 : i32
    %88 = tpu.memref_slice %arg2[%51, %c0_i32_64] : memref<256x128xf32, #tpu.memory_space<any>> -> memref<1x128xf32, #tpu.memory_space<any>>
    %c6_i32_65 = arith.constant 6 : i32
    %c0_i32_66 = arith.constant 0 : i32
    %89 = tpu.memref_slice %arg3[%c6_i32_65, %c0_i32_66] : memref<8x128xf32, #tpu.memory_space<vmem>> -> memref<1x128xf32, #tpu.memory_space<vmem>>
    %90 = tpu.memref_slice %arg4[%c6_i32_63] : memref<8x!tpu.dma_semaphore, #tpu.memory_space<semaphore_mem>> -> memref<1x!tpu.dma_semaphore, #tpu.memory_space<semaphore_mem>>
    %91 = tpu.memref_squeeze %90 : memref<1x!tpu.dma_semaphore, #tpu.memory_space<semaphore_mem>> -> memref<!tpu.dma_semaphore, #tpu.memory_space<semaphore_mem>>
    tpu.wait_dma2 semaphore(%91 : memref<!tpu.dma_semaphore, #tpu.memory_space<semaphore_mem>>) src(%88 : memref<1x128xf32, #tpu.memory_space<any>>) dst(%89 : memref<1x128xf32, #tpu.memory_space<vmem>>)
    %c7_i32_67 = arith.constant 7 : i32
    %c0_i32_68 = arith.constant 0 : i32
    %92 = tpu.memref_slice %arg2[%59, %c0_i32_68] : memref<256x128xf32, #tpu.memory_space<any>> -> memref<1x128xf32, #tpu.memory_space<any>>
    %c7_i32_69 = arith.constant 7 : i32
    %c0_i32_70 = arith.constant 0 : i32
    %93 = tpu.memref_slice %arg3[%c7_i32_69, %c0_i32_70] : memref<8x128xf32, #tpu.memory_space<vmem>> -> memref<1x128xf32, #tpu.memory_space<vmem>>
    %94 = tpu.memref_slice %arg4[%c7_i32_67] : memref<8x!tpu.dma_semaphore, #tpu.memory_space<semaphore_mem>> -> memref<1x!tpu.dma_semaphore, #tpu.memory_space<semaphore_mem>>
    %95 = tpu.memref_squeeze %94 : memref<1x!tpu.dma_semaphore, #tpu.memory_space<semaphore_mem>> -> memref<!tpu.dma_semaphore, #tpu.memory_space<semaphore_mem>>
    tpu.wait_dma2 semaphore(%95 : memref<!tpu.dma_semaphore, #tpu.memory_space<semaphore_mem>>) src(%92 : memref<1x128xf32, #tpu.memory_space<any>>) dst(%93 : memref<1x128xf32, #tpu.memory_space<vmem>>)
    return
  }
  func.func @transform_1(%arg0: i32, %arg1: memref<16xi32, #tpu.memory_space<smem>>) -> (i32, i32) {
    %c0_i32 = arith.constant 0 : i32
    %c0_i32_0 = arith.constant 0 : i32
    return %arg0, %c0_i32 : i32, i32
  }
}

</mosaic_0001>

<llo_original>
// kernel: tpu_custom_call.1
$region0: #{tpu_custom_call.1}
  #allocation0 [shape = 'u32[]', space=smem, size = 0x4, offset = 0x4, fixed_abs, tag = 'smem constant byte address 0x4 - core index']
  #allocation1 [shape = 'u32[144,128]{1,0:T(1,128)}', space=vmem, size = 0x12000, scoped, tag = 'internal scratch']
  #allocation2 [shape = 's32[8]{0}', space=sflag, size = 0x20, scoped, tag = 'scratch operand']
  #allocation3 [shape = 's32[1]{0}', space=sflag, size = 0x4, scoped, tag = 'scoped memory for tpu_custom_call.1']
  #allocation4 [shape = 'u8[512]{0}', space=smem, size = 0x200, scoped, tag = 'prefetched SMEM operand 0']
  #allocation7 [shape = 's32[]', space=sflag, size = 0x4, offset = 0, fixed_abs, tag = 'sflag constant byte address 0x0 - dummy sync flag']
  #allocation8 [shape = 's32[]', space=sflag, size = 0x4, offset = 0, fixed_abs, tag = 'sflag constant byte address 0x0 - dummy sync flag']
  #allocation9 [shape = 'u32[]', space=smem, size = 0x4, offset = 0x44, fixed_abs, tag = 'smem constant byte address 0x44 - assertion arg 0']
  #allocation10 [shape = 'u32[]', space=smem, size = 0x4, offset = 0x48, fixed_abs, tag = 'smem constant byte address 0x48 - assertion arg 1']
  #allocation11 [shape = 's32[]', space=sflag, size = 0x4, offset = 0, fixed_abs, tag = 'sflag constant byte address 0x0 - dummy sync flag']
  #allocation12 [shape = 's32[]', space=sflag, size = 0x4, offset = 0, fixed_abs, tag = 'sflag constant byte address 0x0 - dummy sync flag']
  #allocation13 [shape = 's32[]', space=sflag, size = 0x4, offset = 0, fixed_abs, tag = 'sflag constant byte address 0x0 - dummy sync flag']
  #allocation14 [shape = 's32[]', space=sflag, size = 0x4, offset = 0, fixed_abs, tag = 'sflag constant byte address 0x0 - dummy sync flag']
  #allocation15 [shape = 's32[]', space=sflag, size = 0x4, offset = 0, fixed_abs, tag = 'sflag constant byte address 0x0 - dummy sync flag']
  #allocation16 [shape = 's32[]', space=sflag, size = 0x4, offset = 0, fixed_abs, tag = 'sflag constant byte address 0x0 - dummy sync flag']
  #allocation17 [shape = 's32[]', space=sflag, size = 0x4, offset = 0, fixed_abs, tag = 'sflag constant byte address 0x0 - dummy sync flag']
  #allocation18 [shape = 's32[]', space=sflag, size = 0x4, offset = 0, fixed_abs, tag = 'sflag constant byte address 0x0 - dummy sync flag']
  #allocation19 [shape = 's32[]', space=sflag, size = 0x4, offset = 0, fixed_abs, tag = 'sflag constant byte address 0x0 - dummy sync flag']
  #allocation20 [shape = 's32[]', space=sflag, size = 0x4, offset = 0, fixed_abs, tag = 'sflag constant byte address 0x0 - dummy sync flag']
  #allocation21 [shape = 's32[]', space=sflag, size = 0x4, offset = 0, fixed_abs, tag = 'sflag constant byte address 0x0 - dummy sync flag']
  #allocation22 [shape = 's32[]', space=sflag, size = 0x4, offset = 0, fixed_abs, tag = 'sflag constant byte address 0x0 - dummy sync flag']
  #allocation23 [shape = 's32[]', space=sflag, size = 0x4, offset = 0, fixed_abs, tag = 'sflag constant byte address 0x0 - dummy sync flag']
  #allocation24 [shape = 's32[]', space=sflag, size = 0x4, offset = 0, fixed_abs, tag = 'sflag constant byte address 0x0 - dummy sync flag']
  %s0 = inlined_call_operand.hbm [shape: s32[16], index: 0, kind: input, shape index: {}]
  %s1 = inlined_call_operand.hbm [shape: f32[256,128], index: 1, kind: input, shape index: {}]
  %s2 = inlined_call_operand.hbm [shape: f32[16,128], index: 2, kind: output, shape index: {}]
  %s3 = sld [smem:[#allocation0]]
  $region57: #{tpu_custom_call.1} parent=0
    _
  %s5 = ssub.s32 1, %s3
  %s6 = scalar_select 0, %s5, %s3
  %8 = dma.hbm_to_smem %s0, 16, [#allocation4], [#allocation3]
  %9 = dma.done [#allocation3], 16
  %10 = sfence
  $region1: #{tpu_custom_call.1} parent=0
    #allocation5 [shape = 'u8[8192]{0}', space=vmem, size = 0x2000, scoped, tag = 'output window, operand 0']
    #allocation6 [shape = 's32[2]{0}', space=sflag, size = 0x8, scoped, tag = 'scoped memory for tpu_custom_call.1']
    %11 = vsyncpa [#allocation6], 0
    %s12 = scalar_lea.sflag [#allocation6], 1
    %13 = vsyncpa %s12, 0
    loop: start=0, step=1, limit=3
    $region2: #{tpu_custom_call.1} parent=1 // loop_pre_header
      _
    $region3: #{tpu_custom_call.1} parent=1 // loop_header
      %s15 = sphi 0, %s19
      %p16 = scmp.ge.s32.totalorder %s15, 3
      %s24 = sphi 0, %s26
      %s27 = sphi 0, %s24
      %s37 = sphi 0, %s27
    $region4: #{tpu_custom_call.1} parent=1 // loop_header_branch
      %18 = sbr.rel (%p16) target = $region8
    $region5: #{tpu_custom_call.1} parent=1 // loop_body
      %s20 = ssub.s32 %s15, 1
      %s21 = sadd.s32 %s15, 1
      %s22 = ssub.s32 %s15, %s21
      %p23 = scmp.eq.s32.totalorder %s22, 0
      %s25 = sadd.s32 %s24, 1
      %s26 = scalar_select %p23, %s24, %s25
      %p28 = pneg %p23
      %p29 = scmp.eq.s32.totalorder %s15, 1
      %p30 = por %p28, %p29
      %p31 = scmp.ne.s32.totalorder %s24, %s27
      %p32 = scmp.eq.s32.totalorder %s15, 0
      %p33 = por %p31, %p32
      %p34 = scmp.ne.s32.totalorder %s24, %s27
      %p35 = scmp.eq.s32.totalorder %s20, 1
      %p36 = por %p34, %p35
      %p38 = scmp.ne.s32.totalorder %s27, %s37
      %p39 = scmp.eq.s32.totalorder %s20, 0
      %p40 = por %p38, %p39
      %p41 = scmp.lt.s32.totalorder %s15, 2
      // Predicated region
      $region9: #{tpu_custom_call.1} parent=5 // pred_check
        %p42 = pneg %p41
      $region10: #{tpu_custom_call.1} parent=5 // pred_check_branch
        %44 = sbr.rel (%p42) target = $region12
      $region11: #{tpu_custom_call.1} parent=5 // pred_region
        %p45 = pneg %p33
        %p46 = pneg %p30
        %s47 = sand.u32 %s24, 1
        %s48 = scalar_lea.sflag [#allocation6], %s47
        %s49 = sand.u32 %s24, 1
        %s50 = smul.addr %s49, 8
        %s51 = scalar_lea.vmem [#allocation5], %s50
        %s52 = smul.u32 %s15, 8
        %s53 = sld [smem:[#allocation4 + %s52]]
        %s54 = smul.addr %s53, 16
        %s55 = scalar_lea.hbm %s1, %s54
        // Predicated region
        $region13: #{tpu_custom_call.1} parent=11 // pred_check
          _
        $region14: #{tpu_custom_call.1} parent=11 // pred_check_branch
          %57 = sbr.rel target = $region16
        $region15: #{tpu_custom_call.1} parent=11 // pred_region
          %58 = sst [smem:[#allocation9]] [#allocation8]
          %59 = sst [smem:[#allocation10]] [#allocation7]
        $region16: #{tpu_custom_call.1} parent=11 // pred_fallthru
          _
        %61 = shalt.err (0)
        %s63 = sshll.u32 %s51, 4
        %s64 = int_to_ptr.vmem [resolvable:$true] %s63
        %66 = dma.hbm_to_vmem [thread:$0]  %s55, 16, %s64, [#allocation2]
        %s67 = sadd.s32 %s52, 1
        %s68 = sld [smem:[#allocation4 + %s67]]
        %s69 = smul.addr %s68, 16
        %s70 = scalar_lea.hbm %s1, %s69
        %s71 = scalar_lea.vmem %s51, 1 [#allocation5]
        %s72 = scalar_lea.sflag [#allocation2], 1
        // Predicated region
        $region17: #{tpu_custom_call.1} parent=11 // pred_check
          _
        $region18: #{tpu_custom_call.1} parent=11 // pred_check_branch
          %74 = sbr.rel target = $region20
        $region19: #{tpu_custom_call.1} parent=11 // pred_region
          %75 = sst [smem:[#allocation9]] [#allocation12]
          %76 = sst [smem:[#allocation10]] [#allocation11]
        $region20: #{tpu_custom_call.1} parent=11 // pred_fallthru
          _
        %78 = shalt.err (0)
        %s80 = sshll.u32 %s71, 4
        %s81 = int_to_ptr.vmem [resolvable:$true] %s80
        %83 = dma.hbm_to_vmem [thread:$0]  %s70, 16, %s81, %s72
        %s84 = sadd.s32 %s52, 2
        %s85 = sld [smem:[#allocation4 + %s84]]
        %s86 = smul.addr %s85, 16
        %s87 = scalar_lea.hbm %s1, %s86
        %s88 = scalar_lea.vmem %s51, 2 [#allocation5]
        %s89 = scalar_lea.sflag [#allocation2], 2
        // Predicated region
        $region21: #{tpu_custom_call.1} parent=11 // pred_check
          _
        $region22: #{tpu_custom_call.1} parent=11 // pred_check_branch
          %91 = sbr.rel target = $region24
        $region23: #{tpu_custom_call.1} parent=11 // pred_region
          %92 = sst [smem:[#allocation9]] [#allocation14]
          %93 = sst [smem:[#allocation10]] [#allocation13]
        $region24: #{tpu_custom_call.1} parent=11 // pred_fallthru
          _
        %95 = shalt.err (0)
        %s97 = sshll.u32 %s88, 4
        %s98 = int_to_ptr.vmem [resolvable:$true] %s97
        %100 = dma.hbm_to_vmem [thread:$0]  %s87, 16, %s98, %s89
        %s101 = sadd.s32 %s52, 3
        %s102 = sld [smem:[#allocation4 + %s101]]
        %s103 = smul.addr %s102, 16
        %s104 = scalar_lea.hbm %s1, %s103
        %s105 = scalar_lea.vmem %s51, 3 [#allocation5]
        %s106 = scalar_lea.sflag [#allocation2], 3
        // Predicated region
        $region25: #{tpu_custom_call.1} parent=11 // pred_check
          _
        $region26: #{tpu_custom_call.1} parent=11 // pred_check_branch
          %108 = sbr.rel target = $region28
        $region27: #{tpu_custom_call.1} parent=11 // pred_region
          %109 = sst [smem:[#allocation9]] [#allocation16]
          %110 = sst [smem:[#allocation10]] [#allocation15]
        $region28: #{tpu_custom_call.1} parent=11 // pred_fallthru
          _
        %112 = shalt.err (0)
        %s114 = sshll.u32 %s105, 4
        %s115 = int_to_ptr.vmem [resolvable:$true] %s114
        %117 = dma.hbm_to_vmem [thread:$0]  %s104, 16, %s115, %s106
        %s118 = sadd.s32 %s52, 4
        %s119 = sld [smem:[#allocation4 + %s118]]
        %s120 = smul.addr %s119, 16
        %s121 = scalar_lea.hbm %s1, %s120
        %s122 = scalar_lea.vmem %s51, 4 [#allocation5]
        %s123 = scalar_lea.sflag [#allocation2], 4
        // Predicated region
        $region29: #{tpu_custom_call.1} parent=11 // pred_check
          _
        $region30: #{tpu_custom_call.1} parent=11 // pred_check_branch
          %125 = sbr.rel target = $region32
        $region31: #{tpu_custom_call.1} parent=11 // pred_region
          %126 = sst [smem:[#allocation9]] [#allocation18]
          %127 = sst [smem:[#allocation10]] [#allocation17]
        $region32: #{tpu_custom_call.1} parent=11 // pred_fallthru
          _
        %129 = shalt.err (0)
        %s131 = sshll.u32 %s122, 4
        %s132 = int_to_ptr.vmem [resolvable:$true] %s131
        %134 = dma.hbm_to_vmem [thread:$0]  %s121, 16, %s132, %s123
        %s135 = sadd.s32 %s52, 5
        %s136 = sld [smem:[#allocation4 + %s135]]
        %s137 = smul.addr %s136, 16
        %s138 = scalar_lea.hbm %s1, %s137
        %s139 = scalar_lea.vmem %s51, 5 [#allocation5]
        %s140 = scalar_lea.sflag [#allocation2], 5
        // Predicated region
        $region33: #{tpu_custom_call.1} parent=11 // pred_check
          _
        $region34: #{tpu_custom_call.1} parent=11 // pred_check_branch
          %142 = sbr.rel target = $region36
        $region35: #{tpu_custom_call.1} parent=11 // pred_region
          %143 = sst [smem:[#allocation9]] [#allocation20]
          %144 = sst [smem:[#allocation10]] [#allocation19]
        $region36: #{tpu_custom_call.1} parent=11 // pred_fallthru
          _
        %146 = shalt.err (0)
        %s148 = sshll.u32 %s139, 4
        %s149 = int_to_ptr.vmem [resolvable:$true] %s148
        %151 = dma.hbm_to_vmem [thread:$0]  %s138, 16, %s149, %s140
        %s152 = sadd.s32 %s52, 6
        %s153 = sld [smem:[#allocation4 + %s152]]
        %s154 = smul.addr %s153, 16
        %s155 = scalar_lea.hbm %s1, %s154
        %s156 = scalar_lea.vmem %s51, 6 [#allocation5]
        %s157 = scalar_lea.sflag [#allocation2], 6
        // Predicated region
        $region37: #{tpu_custom_call.1} parent=11 // pred_check
          _
        $region38: #{tpu_custom_call.1} parent=11 // pred_check_branch
          %159 = sbr.rel target = $region40
        $region39: #{tpu_custom_call.1} parent=11 // pred_region
          %160 = sst [smem:[#allocation9]] [#allocation22]
          %161 = sst [smem:[#allocation10]] [#allocation21]
        $region40: #{tpu_custom_call.1} parent=11 // pred_fallthru
          _
        %163 = shalt.err (0)
        %s165 = sshll.u32 %s156, 4
        %s166 = int_to_ptr.vmem [resolvable:$true] %s165
        %168 = dma.hbm_to_vmem [thread:$0]  %s155, 16, %s166, %s157
        %s169 = sadd.s32 %s52, 7
        %s170 = sld [smem:[#allocation4 + %s169]]
        %s171 = smul.addr %s170, 16
        %s172 = scalar_lea.hbm %s1, %s171
        %s173 = scalar_lea.vmem %s51, 7 [#allocation5]
        %s174 = scalar_lea.sflag [#allocation2], 7
        // Predicated region
        $region41: #{tpu_custom_call.1} parent=11 // pred_check
          _
        $region42: #{tpu_custom_call.1} parent=11 // pred_check_branch
          %176 = sbr.rel target = $region44
        $region43: #{tpu_custom_call.1} parent=11 // pred_region
          %177 = sst [smem:[#allocation9]] [#allocation24]
          %178 = sst [smem:[#allocation10]] [#allocation23]
        $region44: #{tpu_custom_call.1} parent=11 // pred_fallthru
          _
        %180 = shalt.err (0)
        %s182 = sshll.u32 %s173, 4
        %s183 = int_to_ptr.vmem [resolvable:$true] %s182
        %185 = dma.hbm_to_vmem [thread:$0]  %s172, 16, %s183, %s174
        %s186 = smul.u32 1, 1
        %s187 = sshll.u32 %s186, 4
        %188 = dma.done [#allocation2], %s187
        %s189 = sshll.u32 %s186, 4
        %190 = dma.done %s72, %s189
        %s191 = sshll.u32 %s186, 4
        %192 = dma.done %s89, %s191
        %s193 = sshll.u32 %s186, 4
        %194 = dma.done %s106, %s193
        %s195 = sshll.u32 %s186, 4
        %196 = dma.done %s123, %s195
        %s197 = sshll.u32 %s186, 4
        %198 = dma.done %s140, %s197
        %s199 = sshll.u32 %s186, 4
        %200 = dma.done %s157, %s199
        %s201 = sshll.u32 %s186, 4
        %202 = dma.done %s174, %s201
        %s203 = sand.u32 %s24, 1
        %s204 = scalar_lea.sflag [#allocation6], %s203
        %s205 = sand.u32 %s24, 1
        %s206 = smul.addr %s205, 8
        %s207 = scalar_lea.vmem [#allocation5], %s206
        // Predicated region
        $region45: #{tpu_custom_call.1} parent=11 // pred_check
          %p208 = pneg %p30
        $region46: #{tpu_custom_call.1} parent=11 // pred_check_branch
          %210 = sbr.rel (%p208) target = $region48
        $region47: #{tpu_custom_call.1} parent=11 // pred_region
          %s212 = ssub.s32 128, 128
          %213 = vsyncadd %s204, %s212
          %s214 = smul.addr %s15, 128
          %s215 = scalar_lea.hbm %s2, %s214
          %s217 = sshll.u32 %s207, 4
          %s218 = int_to_ptr.vmem [resolvable:$true] %s217
          %220 = dma.vmem_to_hbm [thread:$0]  %s218, 128, %s215, %s204
        $region48: #{tpu_custom_call.1} parent=11 // pred_fallthru
          _
      $region12: #{tpu_custom_call.1} parent=5 // pred_fallthru
        _
      %p221 = scmp.le.s32.totalorder 1, %s15
      // Predicated region
      $region49: #{tpu_custom_call.1} parent=5 // pred_check
        %p222 = pneg %p221
      $region50: #{tpu_custom_call.1} parent=5 // pred_check_branch
        %224 = sbr.rel (%p222) target = $region52
      $region51: #{tpu_custom_call.1} parent=5 // pred_region
        %s225 = ssub.s32 %s15, 1
        // Predicated region
        $region53: #{tpu_custom_call.1} parent=51 // pred_check
          %p226 = pneg %p36
        $region54: #{tpu_custom_call.1} parent=51 // pred_check_branch
          %228 = sbr.rel (%p226) target = $region56
        $region55: #{tpu_custom_call.1} parent=51 // pred_region
          %s229 = sand.u32 %s27, 1
          %s230 = scalar_lea.sflag [#allocation6], %s229
          %s231 = sand.u32 %s27, 1
          %s232 = smul.addr %s231, 8
          %s233 = scalar_lea.vmem [#allocation5], %s232
          %234 = dma.done %s230, 128
        $region56: #{tpu_custom_call.1} parent=51 // pred_fallthru
          _
      $region52: #{tpu_custom_call.1} parent=5 // pred_fallthru
        _
    $region6: #{tpu_custom_call.1} parent=1 // loop_footer
      %s19 = sadd.s32 1, %s15
    $region7: #{tpu_custom_call.1} parent=1 // loop_footer_branch
      %14 = sbr.rel target = $region3
    $region8: #{tpu_custom_call.1} parent=1 // loop_exit
      _
    %235 = vsyncpa [#allocation6], 1
    %s236 = scalar_lea.sflag [#allocation6], 1
    %237 = vsyncpa %s236, 1
  %238 = vsyncmov [#allocation2]
  %s239 = vpop.sfrf %238
  %p240 = scmp.eq.s32.totalorder %s239, 0
  %p241 = pneg %p240
  %243 = shalt.err (%p241)
  %s244 = scalar_lea.sflag [#allocation2], 1
  %245 = vsyncmov %s244
  %s246 = vpop.sfrf %245
  %p247 = scmp.eq.s32.totalorder %s246, 0
  %p248 = pneg %p247
  %250 = shalt.err (%p248)
  %s251 = scalar_lea.sflag [#allocation2], 2
  %252 = vsyncmov %s251
  %s253 = vpop.sfrf %252
  %p254 = scmp.eq.s32.totalorder %s253, 0
  %p255 = pneg %p254
  %257 = shalt.err (%p255)
  %s258 = scalar_lea.sflag [#allocation2], 3
  %259 = vsyncmov %s258
  %s260 = vpop.sfrf %259
  %p261 = scmp.eq.s32.totalorder %s260, 0
  %p262 = pneg %p261
  %264 = shalt.err (%p262)
  %s265 = scalar_lea.sflag [#allocation2], 4
  %266 = vsyncmov %s265
  %s267 = vpop.sfrf %266
  %p268 = scmp.eq.s32.totalorder %s267, 0
  %p269 = pneg %p268
  %271 = shalt.err (%p269)
  %s272 = scalar_lea.sflag [#allocation2], 5
  %273 = vsyncmov %s272
  %s274 = vpop.sfrf %273
  %p275 = scmp.eq.s32.totalorder %s274, 0
  %p276 = pneg %p275
  %278 = shalt.err (%p276)
  %s279 = scalar_lea.sflag [#allocation2], 6
  %280 = vsyncmov %s279
  %s281 = vpop.sfrf %280
  %p282 = scmp.eq.s32.totalorder %s281, 0
  %p283 = pneg %p282
  %285 = shalt.err (%p283)
  %s286 = scalar_lea.sflag [#allocation2], 7
  %287 = vsyncmov %s286
  %s288 = vpop.sfrf %287
  %p289 = scmp.eq.s32.totalorder %s288, 0
  %p290 = pneg %p289
  %292 = shalt.err (%p290)

</llo_original>
